<compile_context>
chip_gen: v5e
topology: v5e:2x2
jax: 0.10.0
libtpu: 0.0.40
codegen_flags: <defaults>
</compile_context>

<pallas_src>
import functools

import jax
import jax.numpy as jnp
from jax.experimental import pallas as pl
from jax.experimental.pallas import tpu as pltpu

LN_EPS = 1e-5  # nn.LayerNorm default

_VMEM_CACHE = None


def _vmem_budget_and_limit():
    """Generation-aware (v5e/v6e 128 MiB, v7x 64 MiB) VMEM budget & scoped limit."""
    global _VMEM_CACHE
    if _VMEM_CACHE is None:
        try:
            cap = int(pltpu.get_tpu_info().vmem_capacity_bytes)
        except Exception:  # e.g. no TPU visible at trace time
            cap = 64 * 1024 * 1024
        if cap <= 0:
            cap = 64 * 1024 * 1024
        limit = max(32 * 1024 * 1024, min(int(cap * 0.85), cap - (8 << 20)))
        budget = max(24 * 1024 * 1024, int(cap * 0.70))
        _VMEM_CACHE = (budget, limit)
    return _VMEM_CACHE


# ----------------------------------------------------------------------------
# Kernels
# ----------------------------------------------------------------------------
def _ln_kernel(x_ref, gamma_ref, beta_ref, o_ref):
    # x_ref: (block_rows, dim); gamma/beta: (1, dim)
    x = x_ref[...].astype(jnp.float32)
    mean = jnp.mean(x, axis=-1, keepdims=True)
    centered = x - mean
    var = jnp.mean(centered * centered, axis=-1, keepdims=True)  # biased, like PyTorch
    y = centered * jax.lax.rsqrt(var + LN_EPS)
    y = y * gamma_ref[...].astype(jnp.float32) + beta_ref[...].astype(jnp.float32)
    o_ref[...] = y.astype(o_ref.dtype)


def _ln_packed_kernel(x_ref, gamma_ref, beta_ref, o_ref, *, dim):
    # Lane-dense variant for dim < 128: each 128-lane row carries k = 128//dim
    # independent LayerNorm rows.  Per-group mean/var come from a matmul with a
    # block-diagonal ones matrix (built from iota), so no cross-lane reshape.
    x = x_ref[...].astype(jnp.float32)                      # (br, P), P = k*dim
    p = x.shape[-1]
    li = jax.lax.broadcasted_iota(jnp.int32, (p, p), 0) // dim
    lj = jax.lax.broadcasted_iota(jnp.int32, (p, p), 1) // dim
    grp = (li == lj).astype(jnp.float32)                    # block-diag ones
    inv_dim = 1.0 / dim
    mean = jnp.dot(x, grp, preferred_element_type=jnp.float32) * inv_dim
    centered = x - mean
    var = jnp.dot(centered * centered, grp,
                  preferred_element_type=jnp.float32) * inv_dim
    y = centered * jax.lax.rsqrt(var + LN_EPS)
    y = y * gamma_ref[...].astype(jnp.float32) + beta_ref[...].astype(jnp.float32)
    o_ref[...] = y.astype(o_ref.dtype)


def _fused_ln_linear_kernel(x_ref, gamma_ref, beta_ref, w_ref, b_ref,
                            o_ref, normed_ref):
    # grid = (row_tiles, n_tiles); LayerNorm (incl. affine, in f32) is computed
    # once per row tile into a VMEM scratch, then reused for every N tile.
    @pl.when(pl.program_id(1) == 0)
    def _():
        x = x_ref[...].astype(jnp.float32)
        mean = jnp.mean(x, axis=-1, keepdims=True)
        centered = x - mean
        var = jnp.mean(centered * centered, axis=-1, keepdims=True)
        y = centered * jax.lax.rsqrt(var + LN_EPS)
        y = y * gamma_ref[...].astype(jnp.float32) + beta_ref[...].astype(jnp.float32)
        normed_ref[...] = y.astype(normed_ref.dtype)

    acc = jnp.dot(normed_ref[...], w_ref[...],
                  preferred_element_type=jnp.float32)
    o_ref[...] = (acc + b_ref[...].astype(jnp.float32)).astype(o_ref.dtype)


# ----------------------------------------------------------------------------
# Tiling helpers
# ----------------------------------------------------------------------------
def _row_alignment(dtype):
    # sublane packing: 8 rows for 32-bit, 16 for 16-bit, 32 for 8-bit dtypes
    return 8 * max(1, 4 // jnp.dtype(dtype).itemsize)


def _clamp_block_rows(requested, rows, streamed_bytes_per_row, resident_bytes,
                      row_align, vmem_budget):
    br = max(row_align, (requested // row_align) * row_align)
    while br > row_align and br * streamed_bytes_per_row + resident_bytes > vmem_budget:
        br //= 2
    br = min(br, rows)
    if br < rows:
        br = max(row_align, (br // row_align) * row_align)
    return br


# ----------------------------------------------------------------------------
# Wrappers
# ----------------------------------------------------------------------------
def layernorm_pallas(x, gamma, beta, *, block_rows=1024):
    """LayerNorm over the last dim of x (any leading shape)."""
    orig_shape = x.shape
    dim = orig_shape[-1]
    x2 = x.reshape(-1, dim)
    rows = x2.shape[0]

    budget, limit = _vmem_budget_and_limit()
    itemsize = jnp.dtype(x.dtype).itemsize
    row_align = _row_alignment(x.dtype)

    pack = 1
    if dim < 128 and 128 % dim == 0:
        pack = 128 // dim

    if pack > 1:
        pad = (-rows) % pack
        if pad:
            x2 = jnp.pad(x2, ((0, pad), (0, 0)))
        packed_rows = (rows + pad) // pack
        width = pack * dim
        xp = x2.reshape(packed_rows, width)
        gp = jnp.tile(gamma.reshape(-1).astype(jnp.float32), pack).reshape(1, width)
        bp = jnp.tile(beta.reshape(-1).astype(jnp.float32), pack).reshape(1, width)
        kern = functools.partial(_ln_packed_kernel, dim=dim)
    else:
        packed_rows = rows
        width = dim
        xp = x2
        gp = gamma.reshape(1, dim).astype(jnp.float32)
        bp = beta.reshape(1, dim).astype(jnp.float32)
        kern = _ln_kernel

    streamed_per_row = 2 * (2 * width * itemsize)      # in + out, double-buffered
    resident = 2 * 2 * width * 4                       # gamma/beta (f32, 2 bufs)
    br = _clamp_block_rows(block_rows, packed_rows, streamed_per_row, resident,
                           row_align, budget)

    out = pl.pallas_call(
        kern,
        out_shape=jax.ShapeDtypeStruct((packed_rows, width), x.dtype),
        grid_spec=pltpu.PrefetchScalarGridSpec(
            num_scalar_prefetch=0,
            grid=(pl.cdiv(packed_rows, br),),
            in_specs=[
                pl.BlockSpec((br, width), lambda i: (i, 0)),
                pl.BlockSpec((1, width), lambda i: (0, 0)),
                pl.BlockSpec((1, width), lambda i: (0, 0)),
            ],
            out_specs=pl.BlockSpec((br, width), lambda i: (i, 0)),
        ),
        compiler_params=pltpu.CompilerParams(
            dimension_semantics=("parallel",),
            vmem_limit_bytes=limit,
        ),
    )(xp, gp, bp)

    if pack > 1:
        out = out.reshape(-1, dim)[:rows]
    return out.reshape(orig_shape)


def fused_prenorm_linear_pallas(x, gamma, beta, w, b, *, block_rows=512,
                                mxu_dtype=jnp.bfloat16):
    """LayerNorm(x) @ w + b in one Pallas kernel (one HBM pass over x)."""
    orig_shape = x.shape
    dim = orig_shape[-1]
    out_dim = w.shape[-1]
    x2 = x.reshape(-1, dim)
    rows = x2.shape[0]

    budget, limit = _vmem_budget_and_limit()
    row_align = _row_alignment(x.dtype)
    x_isz = jnp.dtype(x.dtype).itemsize
    o_isz = x_isz
    m_isz = jnp.dtype(mxu_dtype).itemsize

    # gamma/beta applied in-kernel (f32 on the VPU) -- no host-side fold into W.
    g2 = gamma.reshape(1, dim).astype(jnp.float32)
    beta2 = beta.reshape(1, dim).astype(jnp.float32)
    # MXU operands in mxu_dtype; in a real model store weights in bf16 already.
    w_m = w.astype(mxu_dtype)
    bias = b.reshape(1, out_dim).astype(jnp.float32)

    def working_set(br, tn):
        streamed = 2 * br * (dim * x_isz + tn * o_isz)   # x + out tiles, 2 bufs
        w_tile = 2 * (dim * tn * m_isz + tn * 4)         # W + bias, 2 bufs
        affine = 2 * 2 * dim * 4                         # gamma/beta
        scratch = br * dim * m_isz                       # normed scratch
        return streamed + w_tile + affine + scratch

    # Pick the N tile: full W residency when it fits, else 128-aligned shrink.
    tn = out_dim
    min_br = min(row_align, max(rows, 1))
    while tn > 128 and working_set(min_br, tn) > budget:
        tn = max(128, ((tn // 2) // 128) * 128)

    br = max(row_align, (block_rows // row_align) * row_align)
    while br > row_align and working_set(br, tn) > budget:
        br //= 2
    br = min(br, rows)
    if br < rows:
        br = max(row_align, (br // row_align) * row_align)

    out = pl.pallas_call(
        _fused_ln_linear_kernel,
        out_shape=jax.ShapeDtypeStruct((rows, out_dim), x.dtype),
        grid_spec=pltpu.PrefetchScalarGridSpec(
            num_scalar_prefetch=0,
            grid=(pl.cdiv(rows, br), pl.cdiv(out_dim, tn)),
            in_specs=[
                pl.BlockSpec((br, dim), lambda i, n: (i, 0)),
                pl.BlockSpec((1, dim), lambda i, n: (0, 0)),
                pl.BlockSpec((1, dim), lambda i, n: (0, 0)),
                pl.BlockSpec((dim, tn), lambda i, n: (0, n)),
                pl.BlockSpec((1, tn), lambda i, n: (0, n)),
            ],
            out_specs=pl.BlockSpec((br, tn), lambda i, n: (i, n)),
            scratch_shapes=[pltpu.VMEM((br, dim), mxu_dtype)],
        ),
        compiler_params=pltpu.CompilerParams(
            dimension_semantics=("parallel", "arbitrary"),
            vmem_limit_bytes=limit,
        ),
    )(x2, g2, beta2, w_m, bias)
    return out.reshape(orig_shape[:-1] + (out_dim,))


# ----------------------------------------------------------------------------
# Module equivalents
# ----------------------------------------------------------------------------
class LinearFn:
    """A deterministic Linear(dim, out_dim) `fn` that PreNormPallas can fuse."""

    def __init__(self, w, b):
        self.w = w
        self.b = b

    def __call__(self, y):
        return jnp.einsum("...d,de->...e", y, self.w) + self.b


class PreNormPallas:
    """JAX/Pallas equivalent of: x = self.norm(x); return self.fn(x, **kwargs)."""

    def __init__(self, dim, fn, gamma=None, beta=None, mxu_dtype=jnp.bfloat16):
        self.dim = dim
        self.fn = fn
        self.mxu_dtype = mxu_dtype
        # nn.LayerNorm(dim) defaults: weight=ones, bias=zeros (overridable).
        self.gamma = jnp.ones((dim,), jnp.float32) if gamma is None else gamma
        self.beta = jnp.zeros((dim,), jnp.float32) if beta is None else beta

    def __call__(self, x, **kwargs):
        if isinstance(self.fn, LinearFn) and not kwargs:
            # Fused LN + Linear path: single HBM pass over the activations.
            return fused_prenorm_linear_pallas(
                x, self.gamma, self.beta, self.fn.w, self.fn.b,
                mxu_dtype=self.mxu_dtype)
        # Generic path: Pallas LayerNorm, then arbitrary fn as plain-JAX glue.
        return self.fn(layernorm_pallas(x, self.gamma, self.beta), **kwargs)


# ----------------------------------------------------------------------------
# Demo / correctness check
# ----------------------------------------------------------------------------
def _ln_ref(x, gamma, beta):
    mean = jnp.mean(x, axis=-1, keepdims=True)
    var = jnp.mean((x - mean) ** 2, axis=-1, keepdims=True)
    return (x - mean) / jnp.sqrt(var + LN_EPS) * gamma + beta


if __name__ == "__main__":
    batch, seq, dim = 2, 8, 32
    key = jax.random.PRNGKey(0)
    kx, kw, kb, kg, kbeta, kx2 = jax.random.split(key, 6)

    x = jax.random.normal(kx, (batch, seq, dim), jnp.float32)

    # Non-trivial LayerNorm affine params.
    gamma = 1.0 + 0.1 * jax.random.normal(kg, (dim,), jnp.float32)
    beta = 0.1 * jax.random.normal(kbeta, (dim,), jnp.float32)

    # 1) Fused path, bf16 MXU (default): fn is a Linear(dim, dim).
    w = jax.random.normal(kw, (dim, dim), jnp.float32) * 0.02
    b = jax.random.normal(kb, (dim,), jnp.float32) * 0.02
    lin = LinearFn(w, b)
    ref_lin = lin(_ln_ref(x, gamma, beta))

    prenorm_bf16 = PreNormPallas(dim, lin, gamma, beta, mxu_dtype=jnp.bfloat16)
    out_bf16 = jax.block_until_ready(prenorm_bf16(x))
    assert out_bf16.shape == (batch, seq, dim)
    err = jnp.max(jnp.abs(out_bf16 - ref_lin))
    assert err < 1e-2, err

    # 2) Fused path, f32 MXU (tight tolerance, checks the kernel math itself).
    prenorm_f32 = PreNormPallas(dim, lin, gamma, beta, mxu_dtype=jnp.float32)
    out_f32 = jax.block_until_ready(prenorm_f32(x))
    err = jnp.max(jnp.abs(out_f32 - ref_lin))
    assert err < 2e-4, err

    # 3) Generic path: arbitrary fn (GELU) after the packed (lane-dense) LN.
    prenorm_gelu = PreNormPallas(dim, jax.nn.gelu, gamma, beta)
    out_gelu = jax.block_until_ready(prenorm_gelu(x))
    ref_gelu = jax.nn.gelu(_ln_ref(x, gamma, beta))
    assert out_gelu.shape == (batch, seq, dim)
    err = jnp.max(jnp.abs(out_gelu - ref_gelu))
    assert err < 2e-4, err

    # 4) Unpacked LN path (dim >= 128).
    dim2 = 128
    x_big = jax.random.normal(kx2, (batch, seq, dim2), jnp.float32)
    g_big = jnp.ones((dim2,), jnp.float32)
    b_big = jnp.zeros((dim2,), jnp.float32)
    out_big = jax.block_until_ready(layernorm_pallas(x_big, g_big, b_big))
    ref_big = _ln_ref(x_big, g_big, b_big)
    err = jnp.max(jnp.abs(out_big - ref_big))
    assert err < 2e-4, err

    print("KERNEL_OK")
</pallas_src>

<mosaic_0001>
module attributes {stable_mosaic.version = 11 : i64} {
  func.func @_fused_ln_linear_kernel(%arg0: i32, %arg1: i32, %arg2: memref<16x32xf32, #tpu.memory_space<vmem>>, %arg3: memref<1x32xf32, #tpu.memory_space<vmem>>, %arg4: memref<1x32xf32, #tpu.memory_space<vmem>>, %arg5: memref<32x32xbf16, #tpu.memory_space<vmem>>, %arg6: memref<1x32xf32, #tpu.memory_space<vmem>>, %arg7: memref<16x32xf32, #tpu.memory_space<vmem>>, %arg8: memref<16x32xbf16, #tpu.memory_space<vmem>>) attributes {dimension_semantics = [#tpu.dimension_semantics<parallel>, #tpu.dimension_semantics<arbitrary>], iteration_bounds = array<i64: 1, 1>, scalar_prefetch = 0 : i64, scratch_operands = 1 : i64, tpu.core_type = #tpu.core_type<tc>, window_params = [{transform_indices = @transform_0, window_bounds = array<i64: 16, 32>}, {pipeline_mode = #tpu.pipeline_mode<synchronous>, transform_indices = @transform_1, window_bounds = array<i64: 1, 32>}, {pipeline_mode = #tpu.pipeline_mode<synchronous>, transform_indices = @transform_2, window_bounds = array<i64: 1, 32>}, {transform_indices = @transform_3, window_bounds = array<i64: 32, 32>}, {transform_indices = @transform_4, window_bounds = array<i64: 1, 32>}, {transform_indices = @transform_5, window_bounds = array<i64: 16, 32>}]} {
    %c0_i32 = arith.constant 0 : i32
    %0 = arith.cmpi eq, %arg1, %c0_i32 : i32
    %1 = arith.extui %0 : i1 to i32
    %c0_i32_0 = arith.constant 0 : i32
    %2 = arith.cmpi ne, %1, %c0_i32_0 : i32
    scf.if %2 {
      %c0_8 = arith.constant 0 : index
      %c0_9 = arith.constant 0 : index
      %10 = vector.load %arg2[%c0_8, %c0_9] : memref<16x32xf32, #tpu.memory_space<vmem>>, vector<16x32xf32>
      %cst_10 = arith.constant dense<0.000000e+00> : vector<16xf32>
      %11 = vector.multi_reduction <add>, %10, %cst_10 [1] : vector<16x32xf32> to vector<16xf32>
      %12 = vector.shape_cast %11 : vector<16xf32> to vector<16x1xf32>
      %cst_11 = arith.constant 3.200000e+01 : f32
      %13 = vector.broadcast %cst_11 : f32 to vector<16x1xf32>
      %14 = arith.divf %12, %13 : vector<16x1xf32>
      %15 = vector.broadcast %14 : vector<16x1xf32> to vector<16x32xf32>
      %16 = arith.subf %10, %15 : vector<16x32xf32>
      %17 = arith.mulf %16, %16 : vector<16x32xf32>
      %cst_12 = arith.constant dense<0.000000e+00> : vector<16xf32>
      %18 = vector.multi_reduction <add>, %17, %cst_12 [1] : vector<16x32xf32> to vector<16xf32>
      %19 = vector.shape_cast %18 : vector<16xf32> to vector<16x1xf32>
      %cst_13 = arith.constant 3.200000e+01 : f32
      %20 = vector.broadcast %cst_13 : f32 to vector<16x1xf32>
      %21 = arith.divf %19, %20 : vector<16x1xf32>
      %cst_14 = arith.constant 9.99999974E-6 : f32
      %22 = vector.broadcast %cst_14 : f32 to vector<16x1xf32>
      %23 = arith.addf %21, %22 : vector<16x1xf32>
      %24 = math.rsqrt %23 : vector<16x1xf32>
      %25 = vector.broadcast %24 : vector<16x1xf32> to vector<16x32xf32>
      %26 = arith.mulf %16, %25 : vector<16x32xf32>
      %c0_15 = arith.constant 0 : index
      %c0_16 = arith.constant 0 : index
      %27 = vector.load %arg3[%c0_15, %c0_16] : memref<1x32xf32, #tpu.memory_space<vmem>>, vector<1x32xf32>
      %28 = vector.broadcast %27 : vector<1x32xf32> to vector<16x32xf32>
      %29 = arith.mulf %26, %28 : vector<16x32xf32>
      %c0_17 = arith.constant 0 : index
      %c0_18 = arith.constant 0 : index
      %30 = vector.load %arg4[%c0_17, %c0_18] : memref<1x32xf32, #tpu.memory_space<vmem>>, vector<1x32xf32>
      %31 = vector.broadcast %30 : vector<1x32xf32> to vector<16x32xf32>
      %32 = arith.addf %29, %31 : vector<16x32xf32>
      %33 = arith.truncf %32 : vector<16x32xf32> to vector<16x32xbf16>
      %c0_19 = arith.constant 0 : index
      %c0_20 = arith.constant 0 : index
      %34 = vector.load %arg8[%c0_19, %c0_20] : memref<16x32xbf16, #tpu.memory_space<vmem>>, vector<16x32xbf16>
      tpu.vector_store %arg8[%c0_19, %c0_20], %33 {strides = array<i32>} : memref<16x32xbf16, #tpu.memory_space<vmem>>, vector<16x32xbf16>,
    } else {
    }
    %c0 = arith.constant 0 : index
    %c0_1 = arith.constant 0 : index
    %3 = vector.load %arg8[%c0, %c0_1] : memref<16x32xbf16, #tpu.memory_space<vmem>>, vector<16x32xbf16>
    %c0_2 = arith.constant 0 : index
    %c0_3 = arith.constant 0 : index
    %4 = vector.load %arg5[%c0_2, %c0_3] : memref<32x32xbf16, #tpu.memory_space<vmem>>, vector<32x32xbf16>
    %cst = arith.constant dense<0.000000e+00> : vector<16x32xf32>
    %5 = tpu.matmul %3, %4, %cst {dimension_numbers = #tpu.dot_dimension_numbers<[1], [0], [0], [1], [0, 0, 1, 1], [], []>} : vector<16x32xbf16>, vector<32x32xbf16>, vector<16x32xf32> -> vector<16x32xf32>
    %c0_4 = arith.constant 0 : index
    %c0_5 = arith.constant 0 : index
    %6 = vector.load %arg6[%c0_4, %c0_5] : memref<1x32xf32, #tpu.memory_space<vmem>>, vector<1x32xf32>
    %7 = vector.broadcast %6 : vector<1x32xf32> to vector<16x32xf32>
    %8 = arith.addf %5, %7 : vector<16x32xf32>
    %c0_6 = arith.constant 0 : index
    %c0_7 = arith.constant 0 : index
    %9 = vector.load %arg7[%c0_6, %c0_7] : memref<16x32xf32, #tpu.memory_space<vmem>>, vector<16x32xf32>
    tpu.vector_store %arg7[%c0_6, %c0_7], %8 {strides = array<i32>} : memref<16x32xf32, #tpu.memory_space<vmem>>, vector<16x32xf32>,
    return
  }
  func.func @transform_0(%arg0: i32, %arg1: i32) -> (i32, i32) {
    %c0_i32 = arith.constant 0 : i32
    %c0_i32_0 = arith.constant 0 : i32
    return %arg0, %c0_i32 : i32, i32
  }
  func.func @transform_1(%arg0: i32, %arg1: i32) -> (i32, i32) {
    %c0_i32 = arith.constant 0 : i32
    %c0_i32_0 = arith.constant 0 : i32
    %c0_i32_1 = arith.constant 0 : i32
    return %c0_i32, %c0_i32_0 : i32, i32
  }
  func.func @transform_2(%arg0: i32, %arg1: i32) -> (i32, i32) {
    %c0_i32 = arith.constant 0 : i32
    %c0_i32_0 = arith.constant 0 : i32
    %c0_i32_1 = arith.constant 0 : i32
    return %c0_i32, %c0_i32_0 : i32, i32
  }
  func.func @transform_3(%arg0: i32, %arg1: i32) -> (i32, i32) {
    %c0_i32 = arith.constant 0 : i32
    %c0_i32_0 = arith.constant 0 : i32
    return %c0_i32, %arg1 : i32, i32
  }
  func.func @transform_4(%arg0: i32, %arg1: i32) -> (i32, i32) {
    %c0_i32 = arith.constant 0 : i32
    %c0_i32_0 = arith.constant 0 : i32
    return %c0_i32, %arg1 : i32, i32
  }
  func.func @transform_5(%arg0: i32, %arg1: i32) -> (i32, i32) {
    %c0_i32 = arith.constant 0 : i32
    return %arg0, %arg1 : i32, i32
  }
}

</mosaic_0001>

<llo_original>
// kernel: tpu_custom_call.1
$region0: #{tpu_custom_call.1}
  #allocation0 [shape = 'u32[]', space=smem, size = 0x4, offset = 0x4, fixed_abs, tag = 'smem constant byte address 0x4 - core index']
  #allocation1 [shape = 'u32[72,128]{1,0:T(1,128)}', space=vmem, size = 0x9000, scoped, tag = 'internal scratch']
  #allocation2 [shape = 'bf16[16,32]{1,0:T(8,128)(2,1)}', space=vmem, size = 0x1000, scoped, tag = 'scratch operand']
  %s0 = inlined_call_operand.hbm [shape: f32[16,32], index: 0, kind: input, shape index: {}]
  %s1 = inlined_call_operand.hbm [shape: f32[1,32], index: 1, kind: input, shape index: {}]
  %s2 = inlined_call_operand.vmem [shape: f32[1,32], index: 2, kind: input, shape index: {}]
  %s3 = inlined_call_operand.hbm [shape: bf16[32,32], index: 3, kind: input, shape index: {}]
  %s4 = inlined_call_operand.vmem [shape: f32[1,32], index: 4, kind: input, shape index: {}]
  %s5 = inlined_call_operand.hbm [shape: f32[16,32], index: 5, kind: output, shape index: {}]
  %s6 = sld [smem:[#allocation0]]
  $region46: #{tpu_custom_call.1} parent=0
    _
  %s8 = ssub.s32 1, %s6
  %s9 = scalar_select 0, %s8, %s6
  $region1: #{tpu_custom_call.1} parent=0
    #allocation3 [shape = 'u8[8192]{0}', space=vmem, size = 0x2000, scoped, tag = 'input window, operand 0, single buffered']
    #allocation4 [shape = 's32[1]{0}', space=sflag, size = 0x4, scoped, tag = 'scoped memory for tpu_custom_call.1']
    #allocation5 [shape = 's32[1]{0}', space=sflag, size = 0x4, scoped, tag = 'scoped memory for tpu_custom_call.1']
    #allocation6 [shape = 'u8[512]{0}', space=vmem, size = 0x400, scoped, tag = 'input window, operand 1, single buffered']
    #allocation7 [shape = 's32[1]{0}', space=sflag, size = 0x4, scoped, tag = 'scoped memory for tpu_custom_call.1']
    #allocation8 [shape = 'u8[8192]{0}', space=vmem, size = 0x2000, scoped, tag = 'input window, operand 3, single buffered']
    #allocation9 [shape = 'u8[8192]{0}', space=vmem, size = 0x2000, scoped, tag = 'output window, operand 0, single buffered']
    %10 = vsyncpa [#allocation4], 0
    %11 = vsyncpa [#allocation7], 0
    %12 = vsyncpa [#allocation5], 0
    // Predicated region
    $region2: #{tpu_custom_call.1} parent=1 // pred_check
      _
    $region3: #{tpu_custom_call.1} parent=1 // pred_check_branch
      %14 = sbr.rel (0) target = $region5
    $region4: #{tpu_custom_call.1} parent=1 // pred_region
      %16 = vsyncadd [#allocation4], 0
      %s17 = sshll.u32 %s0, 4
      %s18 = int_to_ptr.hbm [resolvable:$true] %s17
      %s19 = sshll.u32 [#allocation3], 4
      %s20 = int_to_ptr.vmem [resolvable:$true] %s19
      %25 = dma.hbm_to_vmem [thread:$0]  %s18, 256, %s20, [#allocation4], 128, 128, 8
    $region5: #{tpu_custom_call.1} parent=1 // pred_fallthru
      _
    // Predicated region
    $region6: #{tpu_custom_call.1} parent=1 // pred_check
      _
    $region7: #{tpu_custom_call.1} parent=1 // pred_check_branch
      %27 = sbr.rel (0) target = $region9
    $region8: #{tpu_custom_call.1} parent=1 // pred_region
      %29 = vsyncadd [#allocation7], 0
      %s31 = sshll.u32 %s1, 4
      %s32 = int_to_ptr.hbm [resolvable:$true] %s31
      %s33 = sshll.u32 [#allocation6], 4
      %s34 = int_to_ptr.vmem [resolvable:$true] %s33
      %36 = dma.hbm_to_vmem [thread:$0]  %s32, 16, %s34, [#allocation7]
    $region9: #{tpu_custom_call.1} parent=1 // pred_fallthru
      _
    // Predicated region
    $region10: #{tpu_custom_call.1} parent=1 // pred_check
      _
    $region11: #{tpu_custom_call.1} parent=1 // pred_check_branch
      %38 = sbr.rel (0) target = $region13
    $region12: #{tpu_custom_call.1} parent=1 // pred_region
      _
    $region13: #{tpu_custom_call.1} parent=1 // pred_fallthru
      _
    // Predicated region
    $region14: #{tpu_custom_call.1} parent=1 // pred_check
      _
    $region15: #{tpu_custom_call.1} parent=1 // pred_check_branch
      %40 = sbr.rel (0) target = $region17
    $region16: #{tpu_custom_call.1} parent=1 // pred_region
      %42 = vsyncadd [#allocation7], 0
      %s43 = sshll.u32 %s3, 4
      %s44 = int_to_ptr.hbm [resolvable:$true] %s43
      %s45 = sshll.u32 [#allocation8], 4
      %s46 = int_to_ptr.vmem [resolvable:$true] %s45
      %51 = dma.hbm_to_vmem [thread:$0]  %s44, 256, %s46, [#allocation7], 64, 64, 4
    $region17: #{tpu_custom_call.1} parent=1 // pred_fallthru
      _
    // Predicated region
    $region18: #{tpu_custom_call.1} parent=1 // pred_check
      _
    $region19: #{tpu_custom_call.1} parent=1 // pred_check_branch
      %53 = sbr.rel (0) target = $region21
    $region20: #{tpu_custom_call.1} parent=1 // pred_region
      _
    $region21: #{tpu_custom_call.1} parent=1 // pred_fallthru
      _
    // Predicated region
    $region22: #{tpu_custom_call.1} parent=1 // pred_check
      _
    $region23: #{tpu_custom_call.1} parent=1 // pred_check_branch
      %55 = sbr.rel (0) target = $region25
    $region24: #{tpu_custom_call.1} parent=1 // pred_region
      %57 = dma.done [#allocation4], 256
    $region25: #{tpu_custom_call.1} parent=1 // pred_fallthru
      _
    // Predicated region
    $region26: #{tpu_custom_call.1} parent=1 // pred_check
      _
    $region27: #{tpu_custom_call.1} parent=1 // pred_check_branch
      %59 = sbr.rel (0) target = $region29
    $region28: #{tpu_custom_call.1} parent=1 // pred_region
      %61 = dma.done [#allocation7], 16
    $region29: #{tpu_custom_call.1} parent=1 // pred_fallthru
      _
    // Predicated region
    $region30: #{tpu_custom_call.1} parent=1 // pred_check
      _
    $region31: #{tpu_custom_call.1} parent=1 // pred_check_branch
      %63 = sbr.rel (0) target = $region33
    $region32: #{tpu_custom_call.1} parent=1 // pred_region
      %65 = dma.done [#allocation7], 256
    $region33: #{tpu_custom_call.1} parent=1 // pred_fallthru
      _
    %p67 = scmp.eq.s32.totalorder 0, 0
    // Predicated region
    $region34: #{tpu_custom_call.1} parent=1 // pred_check
      %p68 = pneg %p67
    $region35: #{tpu_custom_call.1} parent=1 // pred_check_branch
      %70 = sbr.rel (%p68) target = $region37
    $region36: #{tpu_custom_call.1} parent=1 // pred_region
      %v71 = vld [vmem:[#allocation3] sm:$0xff]
      %v72 = vld [vmem:[#allocation3 + $0x8] sm:$0xff]
      %vm73 = vcmask 261120
      %v74 = vsel %vm73, %v71, 0.0
      %75 = vadd.xlane.f32.xlu0 %v74
      %v76 = vpop.xlane.xlu0 %75
      %v77 = vsel %vm73, %v72, 0.0
      %78 = vadd.xlane.f32.xlu0 %v77
      %v79 = vpop.xlane.xlu0 %78
      %v80 = vrcp.pop 32.0
      %v81 = vmul.f32 32.0, %v80
      %v82 = vsub.f32 1.0, %v81
      %v83 = vmul.f32 %v80, %v82
      %v84 = vadd.f32 %v80, %v83
      %vm85 = vweird.f32 %v80
      %v86 = vsel %vm85, %v80, %v84
      %v87 = vmul.f32 %v76, %v86
      %v88 = vmul.f32 %v79, %v86
      %v89 = vsub.f32 %v71, %v87
      %v90 = vsub.f32 %v72, %v88
      %v91 = vmul.f32 %v89, %v89
      %v92 = vmul.f32 %v90, %v90
      %v93 = vsel %vm73, %v91, 0.0
      %94 = vadd.xlane.f32.xlu0 %v93
      %v95 = vpop.xlane.xlu0 %94
      %v96 = vsel %vm73, %v92, 0.0
      %97 = vadd.xlane.f32.xlu0 %v96
      %v98 = vpop.xlane.xlu0 %97
      %v99 = vmul.f32 %v95, %v86
      %v100 = vmul.f32 %v98, %v86
      %v101 = vadd.f32 %v99, 1e-05
      %v102 = vadd.f32 %v100, 1e-05
      %v103 = vrsqrt.pop %v101
      %v104 = vmul.f32 %v103, %v101
      %v105 = vmul.f32 %v104, %v103
      %v106 = vmul.f32 0.5, %v105
      %v107 = vsub.f32 1.5, %v106
      %v108 = vmul.f32 %v103, %v107
      %vm109 = vweird.f32 %v101
      %vm110 = vweird.f32 %v103
      %vm111 = vmor %vm109, %vm110
      %v112 = vsel %vm111, %v103, %v108
      %v113 = vrsqrt.pop %v102
      %v114 = vmul.f32 %v113, %v102
      %v115 = vmul.f32 %v114, %v113
      %v116 = vmul.f32 0.5, %v115
      %v117 = vsub.f32 1.5, %v116
      %v118 = vmul.f32 %v113, %v117
      %vm119 = vweird.f32 %v102
      %vm120 = vweird.f32 %v113
      %vm121 = vmor %vm119, %vm120
      %v122 = vsel %vm121, %v113, %v118
      %v123 = vmul.f32 %v89, %v112
      %v124 = vmul.f32 %v90, %v122
      %v125 = vld [vmem:[#allocation6] sm:$0x1]
      %v127 = vperm.slane %v125, 0
      %v129 = vmul.f32 %v123, %v127
      %v130 = vmul.f32 %v124, %v127
      %v131 = vld [vmem:[%s2] sm:$0x1]
      %v133 = vperm.slane %v131, 0
      %v135 = vadd.f32 %v129, %v133
      %v136 = vadd.f32 %v130, %v133
      %v137 = vpack.c.bf16 %v135, %v135
      %v138 = vpack.c.bf16 %v136, %v136
      %vm139 = vcmask 257024
      %140 = vst.msk [vmem:[#allocation2] sm:$0xf] %vm139, %v137
      %141 = vst.msk [vmem:[#allocation2 + $0x4] sm:$0xf] %vm139, %v138
    $region37: #{tpu_custom_call.1} parent=1 // pred_fallthru
      _
    %v142 = vld [vmem:[#allocation2] sm:$0xf]
    %v143 = vld [vmem:[#allocation2 + $0x4] sm:$0xf]
    %v144 = vld [vmem:[#allocation8] sm:$0xf]
    %v145 = vld [vmem:[#allocation8 + $0x4] sm:$0xf]
    %v146 = vld [vmem:[#allocation8 + $0x8] sm:$0xf]
    %v147 = vld [vmem:[#allocation8 + $0xc] sm:$0xf]
    %v148 = vld [vmem:[%s4] sm:$0x1]
    %v150 = vperm.slane %v148, 0
    %v154 = vunpack.c.l.b16 %v142
    %v155 = vunpack.c.l.b16 %v143
    %v156 = vpack.c.b16 %v155, %v154
    %v161 = vunpack.c.l.b16 %v144
    %v162 = vunpack.c.l.b16 %v145
    %v163 = vunpack.c.l.b16 %v146
    %v164 = vunpack.c.l.b16 %v147
    %v165 = vpack.c.b16 %v162, %v161
    %v166 = vpack.c.b16 %v164, %v163
    %vm169 = vcmask 261120
    %v171 = vsel %vm169, %v156, 0
    %173 = vmatpush.bf16.msra.mxu0 0
    %174 = vmatpush.bf16.msra.mxu0 0
    %175 = vmatpush.bf16.msra.mxu0 0
    %176 = vmatpush.bf16.msra.mxu0 0
    %177 = vmatpush.bf16.msra.mxu0 0
    %178 = vmatpush.bf16.msra.mxu0 0
    %179 = vmatpush.bf16.msra.mxu0 %v166
    %180 = vmatpush.bf16.msra.mxu0 %v165
    %181 = vmatmul.bf16.gmra.mxu0 %v171
    %v182 = vpop.f32.mrf.mxu0
    %v183 = vadd.f32 %v150, %v182
    %v184 = vpop.f32.mrf.mxu0
    %v185 = vadd.f32 %v150, %v184
    %186 = vdwg.mxu0
    %187 = vst.msk [vmem:[#allocation9] sm:$0xff] %vm169, %v183
    %188 = vst.msk [vmem:[#allocation9 + $0x8] sm:$0xff] %vm169, %v185
    // Predicated region
    $region38: #{tpu_custom_call.1} parent=1 // pred_check
      _
    $region39: #{tpu_custom_call.1} parent=1 // pred_check_branch
      %190 = sbr.rel (0) target = $region41
    $region40: #{tpu_custom_call.1} parent=1 // pred_region
      %192 = vsyncadd [#allocation5], 0
      %s193 = sshll.u32 [#allocation9], 4
      %s194 = int_to_ptr.vmem [resolvable:$true] %s193
      %s195 = sshll.u32 %s5, 4
      %s196 = int_to_ptr.hbm [resolvable:$true] %s195
      %201 = dma.vmem_to_hbm [thread:$0]  %s194, 256, %s196, [#allocation5], 128, 128, 8
    $region41: #{tpu_custom_call.1} parent=1 // pred_fallthru
      _
    // Predicated region
    $region42: #{tpu_custom_call.1} parent=1 // pred_check
      _
    $region43: #{tpu_custom_call.1} parent=1 // pred_check_branch
      %203 = sbr.rel (0) target = $region45
    $region44: #{tpu_custom_call.1} parent=1 // pred_region
      %205 = dma.done [#allocation5], 256
    $region45: #{tpu_custom_call.1} parent=1 // pred_fallthru
      _
    %206 = vsyncpa [#allocation4], 1
    %207 = vsyncpa [#allocation7], 1
    %208 = vsyncpa [#allocation5], 1

</llo_original>
